<compile_context>
chip_gen: v7x
topology: tpu7x:2x2x1
jax: 0.10.0
libtpu: 0.0.40
codegen_flags: <defaults>
</compile_context>

<pallas_src>
import math

import jax
import jax.numpy as jnp
from jax.experimental import pallas as pl
from jax.experimental.pallas import tpu as pltpu


def _pick_q_tile(seq_len: int) -> int:
    """Largest convenient q-tile that divides the sequence length."""
    for t in (512, 256, 128):
        if seq_len % t == 0:
            return t
    return seq_len


# -----------------------------------------------------------------------------
# Wrapper: builds the kernel closure + pallas_call for the given operand set.
# -----------------------------------------------------------------------------
def syntax_aware_attention(
    hidden_states,        # (B, S, H) float
    params,               # dict of weights / biases / syntax embedding table
    syntax_types=None,    # (S,) int32 or None
    attention_mask=None,  # (S, S) or (B, S, S), bool/int; nonzero == masked out
    q_tile=None,          # optional query-tile override
):
    B, S, H = hidden_states.shape
    f32, bf16 = jnp.float32, jnp.bfloat16
    scale = 1.0 / math.sqrt(float(H))

    # PyTorch Linear is y = x @ W^T + b with W (out, in); pre-transpose and fuse.
    wqkv = jnp.concatenate(
        [params["wq"].T, params["wk"].T, params["wv"].T], axis=1
    ).astype(bf16)                                            # (H, 3H) bf16
    bqkv = jnp.concatenate(
        [params["bq"], params["bk"], params["bv"]]
    ).reshape(1, 3 * H).astype(f32)                           # (1, 3H) f32

    has_syntax = syntax_types is not None
    if has_syntax:
        syn = params["syntax_embedding"][syntax_types].astype(f32)   # (S, H)

    has_mask = attention_mask is not None
    mask_is_3d = False
    if has_mask:
        mask = attention_mask.astype(jnp.int8)
        mask_is_3d = mask.ndim == 3

    TQ = q_tile if q_tile is not None else _pick_q_tile(S)
    assert S % TQ == 0, "q_tile must divide seq_len"
    NQ = S // TQ

    # ------------------------------ kernel ---------------------------------
    def kernel(*refs):
        it = iter(refs)
        hs_ref = next(it)                 # (1, S, H)  bf16
        wqkv_ref = next(it)               # (H, 3H)    bf16
        bqkv_ref = next(it)               # (1, 3H)    f32
        syn_ref = next(it) if has_syntax else None     # (S, H) f32
        mask_ref = next(it) if has_mask else None      # (TQ,S) or (1,TQ,S) i8
        ctx_ref = next(it)                # (1, TQ, H) f32
        probs_ref = next(it)              # (1, TQ, S) f32
        q_sc = next(it)                   # (S, H) bf16  (pre-scaled queries)
        k_sc = next(it)                   # (S, H) bf16
        v_sc = next(it)                   # (S, H) bf16

        qi = pl.program_id(1)

        # Once per batch element: fused QKV projection for the full sequence.
        @pl.when(qi == 0)
        def _():
            x = hs_ref[0]                                               # (S, H) bf16
            qkv = jnp.dot(x, wqkv_ref[...],
                          preferred_element_type=jnp.float32)           # (S, 3H) f32
            qkv = qkv + bqkv_ref[...]
            q = qkv[:, :H] * scale                  # fold 1/sqrt(H) into q (O(S*H))
            k = qkv[:, H:2 * H]
            if syn_ref is not None:
                k = k + 0.1 * syn_ref[...]          # syntax-enhanced keys
            v = qkv[:, 2 * H:]
            q_sc[...] = q.astype(jnp.bfloat16)
            k_sc[...] = k.astype(jnp.bfloat16)
            v_sc[...] = v.astype(jnp.bfloat16)

        q_start = pl.multiple_of(qi * TQ, TQ)
        q_t = q_sc[pl.ds(q_start, TQ), :]                               # (TQ, H) bf16

        # scores = (q / sqrt(H)) @ k^T, contracting last dims (no materialized k.T).
        scores = jax.lax.dot_general(
            q_t, k_sc[...],
            dimension_numbers=(((1,), (1,)), ((), ())),
            preferred_element_type=jnp.float32)                         # (TQ, S) f32

        if mask_ref is not None:
            m = mask_ref[...]
            if m.ndim == 3:
                m = m[0]
            scores = jnp.where(m != 0, jnp.float32(-1.0e9), scores)

        # Numerically-stable softmax; reciprocal goes to the EUP slot.
        row_max = jnp.max(scores, axis=-1, keepdims=True)
        e = jnp.exp(scores - row_max)
        denom = jnp.sum(e, axis=-1, keepdims=True)
        probs = e * pl.reciprocal(denom, approx=True)                   # (TQ, S)

        ctx = jnp.dot(probs.astype(jnp.bfloat16), v_sc[...],
                      preferred_element_type=jnp.float32)               # (TQ, H)

        ctx_ref[0] = ctx.astype(ctx_ref.dtype)
        probs_ref[0] = probs.astype(probs_ref.dtype)

    # ------------------------------ specs ----------------------------------
    in_specs = [
        pl.BlockSpec((1, S, H), lambda b, qi: (b, 0, 0)),    # hidden states (refetched per b only)
        pl.BlockSpec((H, 3 * H), lambda b, qi: (0, 0)),      # fused QKV weight (fetched once)
        pl.BlockSpec((1, 3 * H), lambda b, qi: (0, 0)),      # fused bias
    ]
    inputs = [hidden_states.astype(bf16), wqkv, bqkv]

    if has_syntax:
        in_specs.append(pl.BlockSpec((S, H), lambda b, qi: (0, 0)))
        inputs.append(syn)

    if has_mask:
        if mask_is_3d:
            in_specs.append(pl.BlockSpec((1, TQ, S), lambda b, qi: (b, qi, 0)))
        else:
            # Batch-invariant mask: block index never depends on b -> one DMA.
            in_specs.append(pl.BlockSpec((TQ, S), lambda b, qi: (qi, 0)))
        inputs.append(mask)

    out_specs = [
        pl.BlockSpec((1, TQ, H), lambda b, qi: (b, qi, 0)),  # context
        pl.BlockSpec((1, TQ, S), lambda b, qi: (b, qi, 0)),  # attention probs
    ]
    out_shape = (
        jax.ShapeDtypeStruct((B, S, H), f32),
        jax.ShapeDtypeStruct((B, S, S), f32),
    )

    scratch_shapes = [
        pltpu.VMEM((S, H), bf16),   # q (pre-scaled)
        pltpu.VMEM((S, H), bf16),   # k (syntax-enhanced)
        pltpu.VMEM((S, H), bf16),   # v
    ]

    context, probs = pl.pallas_call(
        kernel,
        out_shape=out_shape,
        grid_spec=pltpu.PrefetchScalarGridSpec(
            num_scalar_prefetch=0,
            grid=(B, NQ),
            in_specs=in_specs,
            out_specs=out_specs,
            scratch_shapes=scratch_shapes,
        ),
        compiler_params=pltpu.CompilerParams(
            # batch axis megacore-parallel; q-tile axis carries K/V scratch.
            dimension_semantics=("parallel", "arbitrary"),
            vmem_limit_bytes=64 * 1024 * 1024,
        ),
    )(*inputs)

    return context, probs


# -----------------------------------------------------------------------------
# Pure-JAX reference (mirrors the PyTorch forward exactly) for verification.
# -----------------------------------------------------------------------------
def _reference(hidden_states, params, syntax_types, attention_mask):
    B, S, H = hidden_states.shape
    q = hidden_states @ params["wq"].T + params["bq"]
    k = hidden_states @ params["wk"].T + params["bk"]
    v = hidden_states @ params["wv"].T + params["bv"]
    if syntax_types is not None:
        k = k + 0.1 * params["syntax_embedding"][syntax_types]
    scores = jnp.einsum("bqh,bkh->bqk", q, k) / math.sqrt(H)
    if attention_mask is not None:
        scores = jnp.where(attention_mask, -1.0e9, scores)
    probs = jax.nn.softmax(scores, axis=-1)
    ctx = jnp.einsum("bqk,bkh->bqh", probs, v)
    return ctx, probs


# -----------------------------------------------------------------------------
# Deterministic parameter init + synthetic syntax-tree extraction (host glue).
# -----------------------------------------------------------------------------
def _extract_syntax_types(syntax_tree, seq_len):
    node_type_map = {
        "FunctionDef": 1, "ClassDef": 2, "If": 3, "For": 4, "While": 5,
        "Return": 6, "Assign": 7, "Call": 8, "Name": 9, "Constant": 10,
    }
    length = syntax_tree.get("length", 100)
    types = [0] * length
    for i, node_type in enumerate(syntax_tree.get("nodes", [])):
        if i < length and node_type in node_type_map:
            types[i] = node_type_map[node_type]
    return jnp.asarray(types[:seq_len], dtype=jnp.int32)


def _init_params(key, hidden_size):
    ks = jax.random.split(key, 7)
    scale = 1.0 / math.sqrt(hidden_size)
    return {
        "wq": jax.random.normal(ks[0], (hidden_size, hidden_size), jnp.float32) * scale,
        "bq": jax.random.normal(ks[1], (hidden_size,), jnp.float32) * 0.01,
        "wk": jax.random.normal(ks[2], (hidden_size, hidden_size), jnp.float32) * scale,
        "bk": jax.random.normal(ks[3], (hidden_size,), jnp.float32) * 0.01,
        "wv": jax.random.normal(ks[4], (hidden_size, hidden_size), jnp.float32) * scale,
        "bv": jax.random.normal(ks[5], (hidden_size,), jnp.float32) * 0.01,
        "syntax_embedding": jax.random.normal(ks[6], (100, hidden_size), jnp.float32) * 0.02,
    }


if __name__ == "__main__":
    B, S, H = 2, 8, 32
    key = jax.random.PRNGKey(0)
    k_hs, k_param = jax.random.split(key)

    hidden_states = jax.random.normal(k_hs, (B, S, H), jnp.float32)
    params = _init_params(k_param, H)

    syntax_tree = {
        "length": S,
        "nodes": ["FunctionDef", "Name", "If", "Call", "Return", "Assign", "Constant", "For"],
    }
    syntax_types = _extract_syntax_types(syntax_tree, S)

    # Batch-invariant causal-style boolean mask: True == masked out.
    attn_mask = jnp.triu(jnp.ones((S, S), dtype=bool), k=1)

    # bf16 MXU inputs + approx reciprocal => loosened tolerances vs. f32 reference.
    ATOL, RTOL = 5e-2, 5e-2

    # --- Case 1: with syntax enhancement and mask -------------------------
    ctx, probs = syntax_aware_attention(hidden_states, params, syntax_types, attn_mask)
    ctx = jax.block_until_ready(ctx)
    probs = jax.block_until_ready(probs)
    ref_ctx, ref_probs = _reference(hidden_states, params, syntax_types, attn_mask)
    assert jnp.allclose(ctx, ref_ctx, atol=ATOL, rtol=RTOL), "context mismatch (masked)"
    assert jnp.allclose(probs, ref_probs, atol=ATOL, rtol=RTOL), "probs mismatch (masked)"

    # --- Case 2: no syntax tree, no mask (operands dropped at trace time) --
    ctx2, probs2 = syntax_aware_attention(hidden_states, params, None, None)
    ctx2 = jax.block_until_ready(ctx2)
    probs2 = jax.block_until_ready(probs2)
    ref_ctx2, ref_probs2 = _reference(hidden_states, params, None, None)
    assert jnp.allclose(ctx2, ref_ctx2, atol=ATOL, rtol=RTOL), "context mismatch (plain)"
    assert jnp.allclose(probs2, ref_probs2, atol=ATOL, rtol=RTOL), "probs mismatch (plain)"

    print("KERNEL_OK")
</pallas_src>

<mosaic_0001>
module attributes {stable_mosaic.version = 11 : i64} {
  func.func @kernel(%arg0: i32, %arg1: i32, %arg2: memref<1x8x32xbf16, #tpu.memory_space<vmem>>, %arg3: memref<32x96xbf16, #tpu.memory_space<vmem>>, %arg4: memref<1x96xf32, #tpu.memory_space<vmem>>, %arg5: memref<8x32xf32, #tpu.memory_space<vmem>>, %arg6: memref<8x8xi8, #tpu.memory_space<vmem>>, %arg7: memref<1x8x32xf32, #tpu.memory_space<vmem>>, %arg8: memref<1x8x8xf32, #tpu.memory_space<vmem>>, %arg9: memref<8x32xbf16, #tpu.memory_space<vmem>>, %arg10: memref<8x32xbf16, #tpu.memory_space<vmem>>, %arg11: memref<8x32xbf16, #tpu.memory_space<vmem>>) attributes {dimension_semantics = [#tpu.dimension_semantics<parallel>, #tpu.dimension_semantics<arbitrary>], iteration_bounds = array<i64: 2, 1>, scalar_prefetch = 0 : i64, scratch_operands = 3 : i64, tpu.core_type = #tpu.core_type<tc>, window_params = [{transform_indices = @transform_0, window_bounds = array<i64: 1, 8, 32>}, {pipeline_mode = #tpu.pipeline_mode<synchronous>, transform_indices = @transform_1, window_bounds = array<i64: 32, 96>}, {pipeline_mode = #tpu.pipeline_mode<synchronous>, transform_indices = @transform_2, window_bounds = array<i64: 1, 96>}, {pipeline_mode = #tpu.pipeline_mode<synchronous>, transform_indices = @transform_3, window_bounds = array<i64: 8, 32>}, {transform_indices = @transform_4, window_bounds = array<i64: 8, 8>}, {transform_indices = @transform_5, window_bounds = array<i64: 1, 8, 32>}, {transform_indices = @transform_6, window_bounds = array<i64: 1, 8, 8>}]} {
    %c0_i32 = arith.constant 0 : i32
    %0 = arith.cmpi eq, %arg1, %c0_i32 : i32
    %1 = arith.extui %0 : i1 to i32
    %c0_i32_0 = arith.constant 0 : i32
    %2 = arith.cmpi ne, %1, %c0_i32_0 : i32
    scf.if %2 {
      %c0_17 = arith.constant 0 : index
      %c0_18 = arith.constant 0 : index
      %c0_19 = arith.constant 0 : index
      %33 = vector.load %arg2[%c0_17, %c0_18, %c0_19] : memref<1x8x32xbf16, #tpu.memory_space<vmem>>, vector<1x8x32xbf16>
      %34 = vector.shape_cast %33 : vector<1x8x32xbf16> to vector<8x32xbf16>
      %c0_20 = arith.constant 0 : index
      %c0_21 = arith.constant 0 : index
      %35 = vector.load %arg3[%c0_20, %c0_21] : memref<32x96xbf16, #tpu.memory_space<vmem>>, vector<32x96xbf16>
      %cst_22 = arith.constant dense<0.000000e+00> : vector<8x96xf32>
      %36 = tpu.matmul %34, %35, %cst_22 {dimension_numbers = #tpu.dot_dimension_numbers<[1], [0], [0], [1], [0, 0, 1, 1], [], []>} : vector<8x32xbf16>, vector<32x96xbf16>, vector<8x96xf32> -> vector<8x96xf32>
      %c0_23 = arith.constant 0 : index
      %c0_24 = arith.constant 0 : index
      %37 = vector.load %arg4[%c0_23, %c0_24] : memref<1x96xf32, #tpu.memory_space<vmem>>, vector<1x96xf32>
      %38 = vector.broadcast %37 : vector<1x96xf32> to vector<8x96xf32>
      %39 = arith.addf %36, %38 : vector<8x96xf32>
      %40 = vector.extract_strided_slice %39 {offsets = [0, 0], sizes = [8, 32], strides = [1, 1]} : vector<8x96xf32> to vector<8x32xf32>
      %cst_25 = arith.constant 0.176776692 : f32
      %41 = vector.broadcast %cst_25 : f32 to vector<8x32xf32>
      %42 = arith.mulf %40, %41 : vector<8x32xf32>
      %43 = vector.extract_strided_slice %39 {offsets = [0, 32], sizes = [8, 32], strides = [1, 1]} : vector<8x96xf32> to vector<8x32xf32>
      %c0_26 = arith.constant 0 : index
      %c0_27 = arith.constant 0 : index
      %44 = vector.load %arg5[%c0_26, %c0_27] : memref<8x32xf32, #tpu.memory_space<vmem>>, vector<8x32xf32>
      %cst_28 = arith.constant 1.000000e-01 : f32
      %45 = vector.broadcast %cst_28 : f32 to vector<8x32xf32>
      %46 = arith.mulf %45, %44 : vector<8x32xf32>
      %47 = arith.addf %43, %46 : vector<8x32xf32>
      %48 = vector.extract_strided_slice %39 {offsets = [0, 64], sizes = [8, 32], strides = [1, 1]} : vector<8x96xf32> to vector<8x32xf32>
      %49 = arith.truncf %42 : vector<8x32xf32> to vector<8x32xbf16>
      %c0_29 = arith.constant 0 : index
      %c0_30 = arith.constant 0 : index
      %50 = vector.load %arg9[%c0_29, %c0_30] : memref<8x32xbf16, #tpu.memory_space<vmem>>, vector<8x32xbf16>
      tpu.vector_store %arg9[%c0_29, %c0_30], %49 {strides = array<i32>} : memref<8x32xbf16, #tpu.memory_space<vmem>>, vector<8x32xbf16>,
      %51 = arith.truncf %47 : vector<8x32xf32> to vector<8x32xbf16>
      %c0_31 = arith.constant 0 : index
      %c0_32 = arith.constant 0 : index
      %52 = vector.load %arg10[%c0_31, %c0_32] : memref<8x32xbf16, #tpu.memory_space<vmem>>, vector<8x32xbf16>
      tpu.vector_store %arg10[%c0_31, %c0_32], %51 {strides = array<i32>} : memref<8x32xbf16, #tpu.memory_space<vmem>>, vector<8x32xbf16>,
      %53 = arith.truncf %48 : vector<8x32xf32> to vector<8x32xbf16>
      %c0_33 = arith.constant 0 : index
      %c0_34 = arith.constant 0 : index
      %54 = vector.load %arg11[%c0_33, %c0_34] : memref<8x32xbf16, #tpu.memory_space<vmem>>, vector<8x32xbf16>
      tpu.vector_store %arg11[%c0_33, %c0_34], %53 {strides = array<i32>} : memref<8x32xbf16, #tpu.memory_space<vmem>>, vector<8x32xbf16>,
    } else {
    }
    %c8_i32 = arith.constant 8 : i32
    %3 = arith.muli %arg1, %c8_i32 : i32
    %4 = tpu.assume_multiple %3, 8 : i32
    %5 = arith.index_cast %4 : i32 to index
    %c0 = arith.constant 0 : index
    %6 = vector.load %arg9[%5, %c0] : memref<8x32xbf16, #tpu.memory_space<vmem>>, vector<8x32xbf16>
    %c0_1 = arith.constant 0 : index
    %c0_2 = arith.constant 0 : index
    %7 = vector.load %arg10[%c0_1, %c0_2] : memref<8x32xbf16, #tpu.memory_space<vmem>>, vector<8x32xbf16>
    %cst = arith.constant dense<0.000000e+00> : vector<8x8xf32>
    %8 = tpu.matmul %6, %7, %cst {dimension_numbers = #tpu.dot_dimension_numbers<[1], [1], [0], [0], [0, 0, 1, 0], [], []>} : vector<8x32xbf16>, vector<8x32xbf16>, vector<8x8xf32> -> vector<8x8xf32>
    %c0_3 = arith.constant 0 : index
    %c0_4 = arith.constant 0 : index
    %9 = vector.load %arg6[%c0_3, %c0_4] : memref<8x8xi8, #tpu.memory_space<vmem>>, vector<8x8xi8>
    %c0_i8 = arith.constant 0 : i8
    %10 = vector.broadcast %c0_i8 : i8 to vector<8x8xi8>
    %11 = arith.cmpi ne, %9, %10 : vector<8x8xi8>
    %cst_5 = arith.constant -1.000000e+09 : f32
    %12 = vector.broadcast %cst_5 : f32 to vector<8x8xf32>
    %13 = arith.select %11, %12, %8 : vector<8x8xi1>, vector<8x8xf32>
    %cst_6 = arith.constant dense<0xFF800000> : vector<8xf32>
    %14 = vector.multi_reduction <maximumf>, %13, %cst_6 [1] : vector<8x8xf32> to vector<8xf32>
    %15 = vector.shape_cast %14 : vector<8xf32> to vector<8x1xf32>
    %16 = vector.broadcast %15 : vector<8x1xf32> to vector<8x8xf32>
    %17 = arith.subf %13, %16 : vector<8x8xf32>
    %18 = math.exp %17 : vector<8x8xf32>
    %cst_7 = arith.constant dense<0.000000e+00> : vector<8xf32>
    %19 = vector.multi_reduction <add>, %18, %cst_7 [1] : vector<8x8xf32> to vector<8xf32>
    %20 = vector.shape_cast %19 : vector<8xf32> to vector<8x1xf32>
    %21 = tpu.reciprocal %20 {approx = true} : vector<8x1xf32> -> vector<8x1xf32>
    %22 = vector.broadcast %21 : vector<8x1xf32> to vector<8x8xf32>
    %23 = arith.mulf %18, %22 : vector<8x8xf32>
    %24 = arith.truncf %23 : vector<8x8xf32> to vector<8x8xbf16>
    %c0_8 = arith.constant 0 : index
    %c0_9 = arith.constant 0 : index
    %25 = vector.load %arg11[%c0_8, %c0_9] : memref<8x32xbf16, #tpu.memory_space<vmem>>, vector<8x32xbf16>
    %cst_10 = arith.constant dense<0.000000e+00> : vector<8x32xf32>
    %26 = tpu.matmul %24, %25, %cst_10 {dimension_numbers = #tpu.dot_dimension_numbers<[1], [0], [0], [1], [0, 0, 1, 1], [], []>} : vector<8x8xbf16>, vector<8x32xbf16>, vector<8x32xf32> -> vector<8x32xf32>
    %c0_11 = arith.constant 0 : index
    %c0_12 = arith.constant 0 : index
    %c0_13 = arith.constant 0 : index
    %27 = vector.load %arg7[%c0_11, %c0_12, %c0_13] : memref<1x8x32xf32, #tpu.memory_space<vmem>>, vector<1x8x32xf32>
    %28 = vector.shape_cast %27 : vector<1x8x32xf32> to vector<8x32xf32>
    %29 = vector.shape_cast %26 : vector<8x32xf32> to vector<1x8x32xf32>
    tpu.vector_store %arg7[%c0_11, %c0_12, %c0_13], %29 {strides = array<i32>} : memref<1x8x32xf32, #tpu.memory_space<vmem>>, vector<1x8x32xf32>,
    %c0_14 = arith.constant 0 : index
    %c0_15 = arith.constant 0 : index
    %c0_16 = arith.constant 0 : index
    %30 = vector.load %arg8[%c0_14, %c0_15, %c0_16] : memref<1x8x8xf32, #tpu.memory_space<vmem>>, vector<1x8x8xf32>
    %31 = vector.shape_cast %30 : vector<1x8x8xf32> to vector<8x8xf32>
    %32 = vector.shape_cast %23 : vector<8x8xf32> to vector<1x8x8xf32>
    tpu.vector_store %arg8[%c0_14, %c0_15, %c0_16], %32 {strides = array<i32>} : memref<1x8x8xf32, #tpu.memory_space<vmem>>, vector<1x8x8xf32>,
    return
  }
  func.func @transform_0(%arg0: i32, %arg1: i32) -> (i32, i32, i32) {
    %c0_i32 = arith.constant 0 : i32
    %c0_i32_0 = arith.constant 0 : i32
    %c0_i32_1 = arith.constant 0 : i32
    return %arg0, %c0_i32, %c0_i32_0 : i32, i32, i32
  }
  func.func @transform_1(%arg0: i32, %arg1: i32) -> (i32, i32) {
    %c0_i32 = arith.constant 0 : i32
    %c0_i32_0 = arith.constant 0 : i32
    %c0_i32_1 = arith.constant 0 : i32
    return %c0_i32, %c0_i32_0 : i32, i32
  }
  func.func @transform_2(%arg0: i32, %arg1: i32) -> (i32, i32) {
    %c0_i32 = arith.constant 0 : i32
    %c0_i32_0 = arith.constant 0 : i32
    %c0_i32_1 = arith.constant 0 : i32
    return %c0_i32, %c0_i32_0 : i32, i32
  }
  func.func @transform_3(%arg0: i32, %arg1: i32) -> (i32, i32) {
    %c0_i32 = arith.constant 0 : i32
    %c0_i32_0 = arith.constant 0 : i32
    %c0_i32_1 = arith.constant 0 : i32
    return %c0_i32, %c0_i32_0 : i32, i32
  }
  func.func @transform_4(%arg0: i32, %arg1: i32) -> (i32, i32) {
    %c0_i32 = arith.constant 0 : i32
    %c0_i32_0 = arith.constant 0 : i32
    return %arg1, %c0_i32 : i32, i32
  }
  func.func @transform_5(%arg0: i32, %arg1: i32) -> (i32, i32, i32) {
    %c0_i32 = arith.constant 0 : i32
    %c0_i32_0 = arith.constant 0 : i32
    return %arg0, %arg1, %c0_i32 : i32, i32, i32
  }
  func.func @transform_6(%arg0: i32, %arg1: i32) -> (i32, i32, i32) {
    %c0_i32 = arith.constant 0 : i32
    %c0_i32_0 = arith.constant 0 : i32
    return %arg0, %arg1, %c0_i32 : i32, i32, i32
  }
}

</mosaic_0001>

<llo_original>
// kernel: tpu_custom_call.1
$region0: #{tpu_custom_call.1}
  #allocation0 [shape = 'u32[]', space=smem, size = 0x4, offset = 0x4, fixed_abs, tag = 'smem constant byte address 0x4 - core index']
  #allocation1 [shape = 'u32[144,128]{1,0:T(1,128)}', space=vmem, size = 0x12000, scoped, tag = 'internal scratch']
  #allocation2 [shape = 'bf16[8,32]{1,0:T(8,128)(2,1)}', space=vmem, size = 0x800, scoped, tag = 'scratch operand']
  #allocation3 [shape = 'bf16[8,32]{1,0:T(8,128)(2,1)}', space=vmem, size = 0x800, scoped, tag = 'scratch operand']
  #allocation4 [shape = 'bf16[8,32]{1,0:T(8,128)(2,1)}', space=vmem, size = 0x800, scoped, tag = 'scratch operand']
  %s0 = inlined_call_operand.hbm [shape: bf16[2,8,32], index: 0, kind: input, shape index: {}]
  %s1 = inlined_call_operand.hbm [shape: bf16[32,96], index: 1, kind: input, shape index: {}]
  %s2 = inlined_call_operand.hbm [shape: f32[1,96], index: 2, kind: input, shape index: {}]
  %s3 = inlined_call_operand.hbm [shape: f32[8,32], index: 3, kind: input, shape index: {}]
  %s4 = inlined_call_operand.hbm [shape: s8[8,8], index: 4, kind: input, shape index: {}]
  %s5 = inlined_call_operand.hbm [shape: f32[2,8,32], index: 5, kind: output, shape index: {0}]
  %s6 = inlined_call_operand.hbm [shape: f32[2,8,8], index: 6, kind: output, shape index: {1}]
  %7 = xla_tuple %s5, %s6
  %s8 = sld [smem:[#allocation0]]
  $region85: #{tpu_custom_call.1} parent=0
    _
  %s10 = ssub.s32 1, %s8
  %s11 = scalar_select 0, %s10, %s8
  $region1: #{tpu_custom_call.1} parent=0
    #allocation5 [shape = 'u8[4096]{0}', space=vmem, size = 0x1000, scoped, tag = 'input window, operand 0']
    #allocation6 [shape = 's32[2]{0}', space=sflag, size = 0x8, scoped, tag = 'scoped memory for tpu_custom_call.1']
    #allocation7 [shape = 's32[2]{0}', space=sflag, size = 0x8, scoped, tag = 'scoped memory for tpu_custom_call.1']
    #allocation8 [shape = 'u8[8192]{0}', space=vmem, size = 0x2000, scoped, tag = 'input window, operand 1, single buffered']
    #allocation9 [shape = 's32[1]{0}', space=sflag, size = 0x4, scoped, tag = 'scoped memory for tpu_custom_call.1']
    #allocation10 [shape = 'u8[512]{0}', space=vmem, size = 0x400, scoped, tag = 'input window, operand 2, single buffered']
    #allocation11 [shape = 'u8[4096]{0}', space=vmem, size = 0x1000, scoped, tag = 'input window, operand 3, single buffered']
    #allocation12 [shape = 's32[1]{0}', space=sflag, size = 0x4, scoped, tag = 'scoped memory for tpu_custom_call.1']
    #allocation13 [shape = 'u8[1024]{0}', space=vmem, size = 0x400, scoped, tag = 'input window, operand 4, single buffered']
    #allocation14 [shape = 'u8[8192]{0}', space=vmem, size = 0x2000, scoped, tag = 'output window, operand 0']
    #allocation15 [shape = 'u8[8192]{0}', space=vmem, size = 0x2000, scoped, tag = 'output window, operand 1']
    #allocation16 [shape = 's32[2]{0}', space=sflag, size = 0x8, scoped, tag = 'scoped memory for tpu_custom_call.1']
    %12 = vsyncpa [#allocation6], 0
    %s13 = scalar_lea.sflag [#allocation6], 1
    %14 = vsyncpa %s13, 0
    %15 = vsyncpa [#allocation9], 0
    %16 = vsyncpa [#allocation12], 0
    %17 = vsyncpa [#allocation7], 0
    %s18 = scalar_lea.sflag [#allocation7], 1
    %19 = vsyncpa %s18, 0
    %20 = vsyncpa [#allocation16], 0
    %s21 = scalar_lea.sflag [#allocation16], 1
    %22 = vsyncpa %s21, 0
    loop: start=0, step=1, limit=4
    $region2: #{tpu_custom_call.1} parent=1 // loop_pre_header
      _
    $region3: #{tpu_custom_call.1} parent=1 // loop_header
      %s24 = sphi 0, %s28
      %p25 = scmp.ge.s32.totalorder %s24, 4
      %s31 = sphi 0, %s43
      %s32 = sphi 0, %s39
      %s33 = sphi 0, %s31
      %s34 = sphi 0, %s32
      %s35 = sphi 0, %s33
      %s36 = sphi 0, %s34
      %s46 = sphi 0, %s48
      %s49 = sphi 0, %s46
      %s50 = sphi 0, %s49
      %s66 = sphi 0, %s50
      %s70 = sphi 0, %s70
      %s72 = sphi 0, %s70
      %s73 = sphi 0, %s72
      %s87 = sphi 0, %s73
      %s91 = sphi 0, %s91
      %s93 = sphi 0, %s91
      %s94 = sphi 0, %s93
      %s108 = sphi 0, %s94
      %s112 = sphi 0, %s112
      %s114 = sphi 0, %s112
      %s115 = sphi 0, %s114
      %s129 = sphi 0, %s115
      %s135 = sphi 0, %s137
      %s138 = sphi 0, %s135
      %s139 = sphi 0, %s138
      %s155 = sphi 0, %s139
      %s163 = sphi 0, %s165
      %s166 = sphi 0, %s163
      %s167 = sphi 0, %s166
      %s183 = sphi 0, %s167
      %s191 = sphi 0, %s193
      %s194 = sphi 0, %s191
      %s195 = sphi 0, %s194
      %s211 = sphi 0, %s195
    $region4: #{tpu_custom_call.1} parent=1 // loop_header_branch
      %27 = sbr.rel (%p25) target = $region8
    $region5: #{tpu_custom_call.1} parent=1 // loop_body
      %s29 = ssub.s32 %s24, 1
      %s30 = ssub.s32 %s24, 2
      %s37 = sadd.s32 1, %s32
      %p38 = scmp.ge.s32.totalorder %s37, 1
      %s39 = scalar_select %p38, 0, %s37
      %s40 = sadd.s32 1, %s31
      %s41 = scalar_select %p38, %s40, %s31
      %p42 = scmp.ge.s32.totalorder %s41, 2
      %s43 = scalar_select %p42, 0, %s41
      %s44 = ssub.s32 %s31, %s43
      %p45 = scmp.eq.s32.totalorder %s44, 0
      %s47 = sadd.s32 %s46, 1
      %s48 = scalar_select %p45, %s46, %s47
      %p51 = pneg %p45
      %p52 = scmp.eq.s32.totalorder %s24, 1
      %p53 = por %p51, %p52
      %p54 = scmp.ne.s32.totalorder %s46, %s49
      %p55 = scmp.eq.s32.totalorder %s24, 0
      %p56 = por %p54, %p55
      %p57 = scmp.ne.s32.totalorder %s46, %s49
      %p58 = scmp.eq.s32.totalorder %s29, 1
      %p59 = por %p57, %p58
      %p60 = scmp.ne.s32.totalorder %s49, %s50
      %p61 = scmp.eq.s32.totalorder %s29, 0
      %p62 = por %p60, %p61
      %p63 = scmp.ne.s32.totalorder %s49, %s50
      %p64 = scmp.eq.s32.totalorder %s30, 1
      %p65 = por %p63, %p64
      %p67 = scmp.ne.s32.totalorder %s50, %s66
      %p68 = scmp.eq.s32.totalorder %s30, 0
      %p69 = por %p67, %p68
      %s71 = sadd.s32 %s70, 1
      %p74 = scmp.eq.s32.totalorder %s24, 1
      %p75 = scmp.ne.s32.totalorder %s70, %s72
      %p76 = scmp.eq.s32.totalorder %s24, 0
      %p77 = por %p75, %p76
      %p78 = scmp.ne.s32.totalorder %s70, %s72
      %p79 = scmp.eq.s32.totalorder %s29, 1
      %p80 = por %p78, %p79
      %p81 = scmp.ne.s32.totalorder %s72, %s73
      %p82 = scmp.eq.s32.totalorder %s29, 0
      %p83 = por %p81, %p82
      %p84 = scmp.ne.s32.totalorder %s72, %s73
      %p85 = scmp.eq.s32.totalorder %s30, 1
      %p86 = por %p84, %p85
      %p88 = scmp.ne.s32.totalorder %s73, %s87
      %p89 = scmp.eq.s32.totalorder %s30, 0
      %p90 = por %p88, %p89
      %s92 = sadd.s32 %s91, 1
      %p95 = scmp.eq.s32.totalorder %s24, 1
      %p96 = scmp.ne.s32.totalorder %s91, %s93
      %p97 = scmp.eq.s32.totalorder %s24, 0
      %p98 = por %p96, %p97
      %p99 = scmp.ne.s32.totalorder %s91, %s93
      %p100 = scmp.eq.s32.totalorder %s29, 1
      %p101 = por %p99, %p100
      %p102 = scmp.ne.s32.totalorder %s93, %s94
      %p103 = scmp.eq.s32.totalorder %s29, 0
      %p104 = por %p102, %p103
      %p105 = scmp.ne.s32.totalorder %s93, %s94
      %p106 = scmp.eq.s32.totalorder %s30, 1
      %p107 = por %p105, %p106
      %p109 = scmp.ne.s32.totalorder %s94, %s108
      %p110 = scmp.eq.s32.totalorder %s30, 0
      %p111 = por %p109, %p110
      %s113 = sadd.s32 %s112, 1
      %p116 = scmp.eq.s32.totalorder %s24, 1
      %p117 = scmp.ne.s32.totalorder %s112, %s114
      %p118 = scmp.eq.s32.totalorder %s24, 0
      %p119 = por %p117, %p118
      %p120 = scmp.ne.s32.totalorder %s112, %s114
      %p121 = scmp.eq.s32.totalorder %s29, 1
      %p122 = por %p120, %p121
      %p123 = scmp.ne.s32.totalorder %s114, %s115
      %p124 = scmp.eq.s32.totalorder %s29, 0
      %p125 = por %p123, %p124
      %p126 = scmp.ne.s32.totalorder %s114, %s115
      %p127 = scmp.eq.s32.totalorder %s30, 1
      %p128 = por %p126, %p127
      %p130 = scmp.ne.s32.totalorder %s115, %s129
      %p131 = scmp.eq.s32.totalorder %s30, 0
      %p132 = por %p130, %p131
      %s133 = ssub.s32 %s32, %s39
      %p134 = scmp.eq.s32.totalorder %s133, 0
      %s136 = sadd.s32 %s135, 1
      %s137 = scalar_select %p134, %s135, %s136
      %p140 = pneg %p134
      %p141 = scmp.eq.s32.totalorder %s24, 1
      %p142 = por %p140, %p141
      %p143 = scmp.ne.s32.totalorder %s135, %s138
      %p144 = scmp.eq.s32.totalorder %s24, 0
      %p145 = por %p143, %p144
      %p146 = scmp.ne.s32.totalorder %s135, %s138
      %p147 = scmp.eq.s32.totalorder %s29, 1
      %p148 = por %p146, %p147
      %p149 = scmp.ne.s32.totalorder %s138, %s139
      %p150 = scmp.eq.s32.totalorder %s29, 0
      %p151 = por %p149, %p150
      %p152 = scmp.ne.s32.totalorder %s138, %s139
      %p153 = scmp.eq.s32.totalorder %s30, 1
      %p154 = por %p152, %p153
      %p156 = scmp.ne.s32.totalorder %s139, %s155
      %p157 = scmp.eq.s32.totalorder %s30, 0
      %p158 = por %p156, %p157
      %s159 = ssub.s32 %s31, %s43
      %s160 = ssub.s32 %s32, %s39
      %s161 = sor.u32 %s159, %s160
      %p162 = scmp.eq.s32.totalorder %s161, 0
      %s164 = sadd.s32 %s163, 1
      %s165 = scalar_select %p162, %s163, %s164
      %p168 = pneg %p162
      %p169 = scmp.eq.s32.totalorder %s24, 1
      %p170 = por %p168, %p169
      %p171 = scmp.ne.s32.totalorder %s163, %s166
      %p172 = scmp.eq.s32.totalorder %s24, 0
      %p173 = por %p171, %p172
      %p174 = scmp.ne.s32.totalorder %s163, %s166
      %p175 = scmp.eq.s32.totalorder %s29, 1
      %p176 = por %p174, %p175
      %p177 = scmp.ne.s32.totalorder %s166, %s167
      %p178 = scmp.eq.s32.totalorder %s29, 0
      %p179 = por %p177, %p178
      %p180 = scmp.ne.s32.totalorder %s166, %s167
      %p181 = scmp.eq.s32.totalorder %s30, 1
      %p182 = por %p180, %p181
      %p184 = scmp.ne.s32.totalorder %s167, %s183
      %p185 = scmp.eq.s32.totalorder %s30, 0
      %p186 = por %p184, %p185
      %s187 = ssub.s32 %s31, %s43
      %s188 = ssub.s32 %s32, %s39
      %s189 = sor.u32 %s187, %s188
      %p190 = scmp.eq.s32.totalorder %s189, 0
      %s192 = sadd.s32 %s191, 1
      %s193 = scalar_select %p190, %s191, %s192
      %p196 = pneg %p190
      %p197 = scmp.eq.s32.totalorder %s24, 1
      %p198 = por %p196, %p197
      %p199 = scmp.ne.s32.totalorder %s191, %s194
      %p200 = scmp.eq.s32.totalorder %s24, 0
      %p201 = por %p199, %p200
      %p202 = scmp.ne.s32.totalorder %s191, %s194
      %p203 = scmp.eq.s32.totalorder %s29, 1
      %p204 = por %p202, %p203
      %p205 = scmp.ne.s32.totalorder %s194, %s195
      %p206 = scmp.eq.s32.totalorder %s29, 0
      %p207 = por %p205, %p206
      %p208 = scmp.ne.s32.totalorder %s194, %s195
      %p209 = scmp.eq.s32.totalorder %s30, 1
      %p210 = por %p208, %p209
      %p212 = scmp.ne.s32.totalorder %s195, %s211
      %p213 = scmp.eq.s32.totalorder %s30, 0
      %p214 = por %p212, %p213
      %p215 = scmp.le.s32.totalorder 1, %s24
      %p216 = scmp.lt.s32.totalorder %s24, 3
      %p217 = pnand %p215, %p216
      %p218 = pneg %p217
      // Predicated region
      $region9: #{tpu_custom_call.1} parent=5 // pred_check
        _
      $region10: #{tpu_custom_call.1} parent=5 // pred_check_branch
        %220 = sbr.rel (%p217) target = $region12
      $region11: #{tpu_custom_call.1} parent=5 // pred_region
        %s221 = ssub.s32 %s24, 1
        // Predicated region
        $region13: #{tpu_custom_call.1} parent=11 // pred_check
          %p222 = pneg %p83
        $region14: #{tpu_custom_call.1} parent=11 // pred_check_branch
          %224 = sbr.rel (%p222) target = $region16
        $region15: #{tpu_custom_call.1} parent=11 // pred_region
          %s226 = ssub.s32 256, 256
          %227 = vsyncadd [#allocation9], %s226
          %s228 = sshll.u32 [#allocation8], 4
          %s229 = int_to_ptr.vmem [resolvable:$true] %s228
          %234 = dma.hbm_to_vmem [thread:$0]  %s1, 256, %s229, [#allocation9], 64, 64, 4
        $region16: #{tpu_custom_call.1} parent=11 // pred_fallthru
          _
        // Predicated region
        $region17: #{tpu_custom_call.1} parent=11 // pred_check
          %p235 = pneg %p104
        $region18: #{tpu_custom_call.1} parent=11 // pred_check_branch
          %237 = sbr.rel (%p235) target = $region20
        $region19: #{tpu_custom_call.1} parent=11 // pred_region
          %s239 = ssub.s32 16, 16
          %240 = vsyncadd [#allocation9], %s239
          %s242 = sshll.u32 [#allocation10], 4
          %s243 = int_to_ptr.vmem [resolvable:$true] %s242
          %245 = dma.hbm_to_vmem [thread:$0]  %s2, 16, %s243, [#allocation9]
        $region20: #{tpu_custom_call.1} parent=11 // pred_fallthru
          _
        // Predicated region
        $region21: #{tpu_custom_call.1} parent=11 // pred_check
          %p246 = pneg %p125
        $region22: #{tpu_custom_call.1} parent=11 // pred_check_branch
          %248 = sbr.rel (%p246) target = $region24
        $region23: #{tpu_custom_call.1} parent=11 // pred_region
          %s250 = ssub.s32 128, 128
          %251 = vsyncadd [#allocation12], %s250
          %s253 = sshll.u32 [#allocation11], 4
          %s254 = int_to_ptr.vmem [resolvable:$true] %s253
          %256 = dma.hbm_to_vmem [thread:$0]  %s3, 128, %s254, [#allocation12]
        $region24: #{tpu_custom_call.1} parent=11 // pred_fallthru
          _
        // Predicated region
        $region25: #{tpu_custom_call.1} parent=11 // pred_check
          %p257 = pneg %p151
        $region26: #{tpu_custom_call.1} parent=11 // pred_check_branch
          %259 = sbr.rel (%p257) target = $region28
        $region27: #{tpu_custom_call.1} parent=11 // pred_region
          %s261 = ssub.s32 32, 32
          %262 = vsyncadd [#allocation12], %s261
          %s263 = smul.addr %s34, 32
          %s264 = scalar_lea.hbm %s4, %s263
          %s266 = sshll.u32 [#allocation13], 4
          %s267 = int_to_ptr.vmem [resolvable:$true] %s266
          %269 = dma.hbm_to_vmem [thread:$0]  %s264, 32, %s267, [#allocation12]
        $region28: #{tpu_custom_call.1} parent=11 // pred_fallthru
          _
      $region12: #{tpu_custom_call.1} parent=5 // pred_fallthru
        _
      %p270 = scmp.lt.s32.totalorder %s24, 2
      // Predicated region
      $region29: #{tpu_custom_call.1} parent=5 // pred_check
        %p271 = pneg %p270
      $region30: #{tpu_custom_call.1} parent=5 // pred_check_branch
        %273 = sbr.rel (%p271) target = $region32
      $region31: #{tpu_custom_call.1} parent=5 // pred_region
        // Predicated region
        $region33: #{tpu_custom_call.1} parent=31 // pred_check
          %p274 = pneg %p56
        $region34: #{tpu_custom_call.1} parent=31 // pred_check_branch
          %276 = sbr.rel (%p274) target = $region36
        $region35: #{tpu_custom_call.1} parent=31 // pred_region
          %s277 = sand.u32 %s46, 1
          %s278 = scalar_lea.sflag [#allocation6], %s277
          %s279 = sand.u32 %s46, 1
          %s280 = smul.addr %s279, 4
          %s281 = scalar_lea.vmem [#allocation5], %s280
          %s283 = ssub.s32 64, 64
          %284 = vsyncadd %s278, %s283
          %s285 = smul.addr %s31, 64
          %s286 = scalar_lea.hbm %s0, %s285
          %s288 = sshll.u32 %s281, 4
          %s289 = int_to_ptr.vmem [resolvable:$true] %s288
          %291 = dma.hbm_to_vmem [thread:$0]  %s286, 64, %s289, %s278
        $region36: #{tpu_custom_call.1} parent=31 // pred_fallthru
          _
      $region32: #{tpu_custom_call.1} parent=5 // pred_fallthru
        _
      %p292 = scmp.le.s32.totalorder 1, %s24
      %p293 = scmp.lt.s32.totalorder %s24, 3
      %p294 = pnand %p292, %p293
      %p295 = pneg %p294
      // Predicated region
      $region37: #{tpu_custom_call.1} parent=5 // pred_check
        _
      $region38: #{tpu_custom_call.1} parent=5 // pred_check_branch
        %297 = sbr.rel (%p294) target = $region40
      $region39: #{tpu_custom_call.1} parent=5 // pred_region
        %s298 = ssub.s32 %s24, 1
        %s299 = sand.u32 %s49, 1
        %s300 = scalar_lea.sflag [#allocation6], %s299
        %s301 = sand.u32 %s49, 1
        %s302 = smul.addr %s301, 4
        %s303 = scalar_lea.vmem [#allocation5], %s302
        // Predicated region
        $region41: #{tpu_custom_call.1} parent=39 // pred_check
          %p304 = pneg %p62
        $region42: #{tpu_custom_call.1} parent=39 // pred_check_branch
          %306 = sbr.rel (%p304) target = $region44
        $region43: #{tpu_custom_call.1} parent=39 // pred_region
          %307 = dma.done %s300, 64
        $region44: #{tpu_custom_call.1} parent=39 // pred_fallthru
          _
        // Predicated region
        $region45: #{tpu_custom_call.1} parent=39 // pred_check
          %p308 = pneg %p83
        $region46: #{tpu_custom_call.1} parent=39 // pred_check_branch
          %310 = sbr.rel (%p308) target = $region48
        $region47: #{tpu_custom_call.1} parent=39 // pred_region
          %311 = dma.done [#allocation9], 256
        $region48: #{tpu_custom_call.1} parent=39 // pred_fallthru
          _
        // Predicated region
        $region49: #{tpu_custom_call.1} parent=39 // pred_check
          %p312 = pneg %p104
        $region50: #{tpu_custom_call.1} parent=39 // pred_check_branch
          %314 = sbr.rel (%p312) target = $region52
        $region51: #{tpu_custom_call.1} parent=39 // pred_region
          %315 = dma.done [#allocation9], 16
        $region52: #{tpu_custom_call.1} parent=39 // pred_fallthru
          _
        // Predicated region
        $region53: #{tpu_custom_call.1} parent=39 // pred_check
          %p316 = pneg %p125
        $region54: #{tpu_custom_call.1} parent=39 // pred_check_branch
          %318 = sbr.rel (%p316) target = $region56
        $region55: #{tpu_custom_call.1} parent=39 // pred_region
          %319 = dma.done [#allocation12], 128
        $region56: #{tpu_custom_call.1} parent=39 // pred_fallthru
          _
        // Predicated region
        $region57: #{tpu_custom_call.1} parent=39 // pred_check
          %p320 = pneg %p151
        $region58: #{tpu_custom_call.1} parent=39 // pred_check_branch
          %322 = sbr.rel (%p320) target = $region60
        $region59: #{tpu_custom_call.1} parent=39 // pred_region
          %323 = dma.done [#allocation12], 32
        $region60: #{tpu_custom_call.1} parent=39 // pred_fallthru
          _
        %s324 = sand.u32 %s49, 1
        %s325 = scalar_lea.sflag [#allocation6], %s324
        %s326 = sand.u32 %s49, 1
        %s327 = smul.addr %s326, 4
        %s328 = scalar_lea.vmem [#allocation5], %s327
        %p329 = pneg %p62
        %p330 = pneg %p59
        %p331 = pneg %p83
        %p332 = pneg %p80
        %p333 = pneg %p104
        %p334 = pneg %p101
        %p335 = pneg %p125
        %p336 = pneg %p122
        %p337 = pneg %p151
        %p338 = pneg %p148
        %p339 = pneg %p179
        %p340 = pneg %p176
        %s341 = sand.u32 %s166, 1
        %s342 = scalar_lea.sflag [#allocation7], %s341
        %s343 = sand.u32 %s166, 1
        %s344 = smul.addr %s343, 8
        %s345 = scalar_lea.vmem [#allocation14], %s344
        %p346 = pneg %p207
        %p347 = pneg %p204
        %s348 = sand.u32 %s194, 1
        %s349 = scalar_lea.sflag [#allocation16], %s348
        %s350 = sand.u32 %s194, 1
        %s351 = smul.addr %s350, 8
        %s352 = scalar_lea.vmem [#allocation15], %s351
        %p356 = scmp.eq.s32.totalorder %s34, 0
        // Predicated region
        $region61: #{tpu_custom_call.1} parent=39 // pred_check
          %p357 = pneg %p356
        $region62: #{tpu_custom_call.1} parent=39 // pred_check_branch
          %359 = sbr.rel (%p357) target = $region64
        $region63: #{tpu_custom_call.1} parent=39 // pred_region
          %v360 = vld [vmem:[%s303] sm:$0xf]
          %v361 = vld [vmem:[#allocation8] sm:$0xf]
          %v362 = vld [vmem:[#allocation8 + $0x4] sm:$0xf]
          %v363 = vld [vmem:[#allocation8 + $0x8] sm:$0xf]
          %v364 = vld [vmem:[#allocation8 + $0xc] sm:$0xf]
          %v365 = vld [vmem:[#allocation10] sm:$0x1]
          %v367 = vlaneseq
          %v368 = vshrl.u32 %v367, 7
          %v369 = vsub.s32 0, %v368
          %v370 = vrot.slane %v365, %v369
          %v376 = vunpack.c.l.b16 %v361
          %v377 = vunpack.c.l.b16 %v362
          %v378 = vunpack.c.l.b16 %v363
          %v379 = vunpack.c.l.b16 %v364
          %v380 = vpack.c.b16 %v377, %v376
          %v381 = vpack.c.b16 %v379, %v378
          %vm384 = vcmask 261120
          %v386 = vsel %vm384, %v360, 0
          %388 = vmatprep.subr.bf16.mxu0 0
          %389 = vmatpush1.bf16.msra.mxu0 %v380
          %390 = vmatprep.subr.bf16.mxu0 0
          %391 = vmatpush1.bf16.msra.mxu0 %v381
          %392 = vmatprep.subr.bf16.mxu0 0
          %393 = vmatpush1.bf16.msra.mxu0 0
          %394 = vmatprep.subr.bf16.mxu0 0
          %395 = vmatpush1.bf16.msra.mxu0 0
          %396 = vmatprep.subr.bf16.mxu0 0
          %397 = vmatpush1.bf16.msra.mxu0 0
          %398 = vmatprep.subr.bf16.mxu0 0
          %399 = vmatpush1.bf16.msra.mxu0 0
          %400 = vmatprep.subr.bf16.mxu0 0
          %401 = vmatpush1.bf16.msra.mxu0 0
          %402 = vmatprep.subr.bf16.mxu0 0
          %403 = vmatpush1.bf16.msra.mxu0 0
          %404 = vmatprep.subr.bf16.mxu0 0
          %405 = vmatpush1.bf16.msra.mxu0 0
          %406 = vmatprep.subr.bf16.mxu0 0
          %407 = vmatpush1.bf16.msra.mxu0 0
          %408 = vmatprep.subr.bf16.mxu0 0
          %409 = vmatpush1.bf16.msra.mxu0 0
          %410 = vmatprep.subr.bf16.mxu0 0
          %411 = vmatpush1.bf16.msra.mxu0 0
          %412 = vmatprep.subr.bf16.mxu0 0
          %413 = vmatpush1.bf16.msra.mxu0 0
          %414 = vmatprep.subr.bf16.mxu0 0
          %415 = vmatpush1.bf16.msra.mxu0 0
          %416 = vmatprep.subr.bf16.mxu0 0
          %417 = vmatpush1.bf16.msra.mxu0 0
          %418 = vmatprep.subr.bf16.mxu0 0
          %419 = vmatpush1.bf16.msra.mxu0 0
          %420 = vmatprep.mubr.bf16.mxu0 0
          %421 = vmatmul.mubr.bf16.gmra.mrb[0].mxu0 %v386
          %v422 = vpop.f32.mrb[0].mxu0
          %v423 = vadd.f32 %v370, %v422
          %v424 = vpop.f32.mrb[0].mxu0
          %v425 = vpop.f32.mrb[0].mxu0
          %v426 = vpop.f32.mrb[0].mxu0
          %427 = vdwg.mxu0
          %v428 = vmul.f32 %v423, 0.17677669
          %v429 = vld [vmem:[#allocation11] sm:$0xff]
          %v430 = vmul.f32 %v429, 0.1
          %432 = vrot.lane.b32.xlu0 %v430, 32
          %v433 = vpop.permute.xlu0 %432
          %v435 = vadd.f32 %v423, %v433
          %v436 = vpack.c.bf16 %v428, %v428
          %vm437 = vcmask 257024
          %438 = vst.msk [vmem:[#allocation2] sm:$0xf] %vm437, %v436
          %v439 = vpack.c.bf16 %v435, %v435
          %v441 = vunpack.c.l.b16 %v439
          %v442 = vpack.c.b16 %v441, %v441
          %443 = vrot.lane.b32.xlu0 %v442, 96
          %v444 = vpop.permute.xlu0 %443
          %446 = vst.msk [vmem:[#allocation3] sm:$0xf] %vm437, %v444
          %v447 = vpack.c.bf16 %v423, %v423
          %v449 = vunpack.c.l.b16 %v447
          %v450 = vpack.c.b16 %v449, %v449
          %451 = vrot.lane.b32.xlu0 %v450, 64
          %v452 = vpop.permute.xlu0 %451
          %454 = vst.msk [vmem:[#allocation4] sm:$0xf] %vm437, %v452
        $region64: #{tpu_custom_call.1} parent=39 // pred_fallthru
          _
        %s455 = smul.u32 %s34, 8
        %s456 = sshra.s32 %s455, 3
        %s457 = sand.u32 %s455, 7
        %s458 = smul.addr %s456, 4
        %s459 = scalar_lea.vmem [#allocation2], %s458
        %v460 = vld [vmem:[%s459] sm:$0xf]
        %v461 = vld [vmem:[#allocation3] sm:$0xf]
        %vm462 = vcmask 261120
        %v464 = vsel %vm462, %v460, 0
        %v467 = vsel %vm462, %v461, 0
        %469 = vmatprep.subr.bf16.mxu0 0
        %470 = vmatpush1.bf16.xpose.msra.mxu0 %v467
        %471 = vmatprep.subr.bf16.mxu0 0
        %472 = vmatpush1.bf16.xpose.msra.mxu0 0
        %473 = vmatprep.subr.bf16.mxu0 0
        %474 = vmatpush1.bf16.xpose.msra.mxu0 0
        %475 = vmatprep.subr.bf16.mxu0 0
        %476 = vmatpush1.bf16.xpose.msra.mxu0 0
        %477 = vmatprep.subr.bf16.mxu0 0
        %478 = vmatpush1.bf16.xpose.msra.mxu0 0
        %479 = vmatprep.subr.bf16.mxu0 0
        %480 = vmatpush1.bf16.xpose.msra.mxu0 0
        %481 = vmatprep.subr.bf16.mxu0 0
        %482 = vmatpush1.bf16.xpose.msra.mxu0 0
        %483 = vmatprep.subr.bf16.mxu0 0
        %484 = vmatpush1.bf16.xpose.msra.mxu0 0
        %485 = vmatprep.subr.bf16.mxu0 0
        %486 = vmatpush1.bf16.xpose.msra.mxu0 0
        %487 = vmatprep.subr.bf16.mxu0 0
        %488 = vmatpush1.bf16.xpose.msra.mxu0 0
        %489 = vmatprep.subr.bf16.mxu0 0
        %490 = vmatpush1.bf16.xpose.msra.mxu0 0
        %491 = vmatprep.subr.bf16.mxu0 0
        %492 = vmatpush1.bf16.xpose.msra.mxu0 0
        %493 = vmatprep.subr.bf16.mxu0 0
        %494 = vmatpush1.bf16.xpose.msra.mxu0 0
        %495 = vmatprep.subr.bf16.mxu0 0
        %496 = vmatpush1.bf16.xpose.msra.mxu0 0
        %497 = vmatprep.subr.bf16.mxu0 0
        %498 = vmatpush1.bf16.xpose.msra.mxu0 0
        %499 = vmatprep.subr.bf16.mxu0 0
        %500 = vmatpush1.bf16.xpose.msra.mxu0 0
        %501 = vmatprep.mubr.bf16.mxu0 0
        %502 = vmatmul.mubr.bf16.gmra.mrb[0].mxu0 %v464
        %v503 = vpop.f32.mrb[0].mxu0
        %v504 = vadd.f32 0.0, %v503
        %v505 = vpop.f32.mrb[0].mxu0
        %v506 = vpop.f32.mrb[0].mxu0
        %v507 = vpop.f32.mrb[0].mxu0
        %508 = vdwg.mxu0
        %v509 = vld [vmem:[#allocation13] sm:$0x3]
        %vm510 = vnez %v509
        %v511 = vsel %vm510, 16843009, 0
        %v512 = vunpack.c.0.s8 %v511
        %vm513 = vcmp.ne.s32.totalorder %v512, 0
        %v514 = vsel %vm513, -1e+09, %v504
        %vm515 = vcmask 64512
        %v516 = vsel %vm515, %v514, -inf
        %517 = vmax.xlane.f32.xlu0 %v516
        %v518 = vpop.xlane.xlu0 %517
        %v519 = vsub.f32 %v514, %v518
        %v520 = vmul.f32 %v519, 1.442695
        %v521 = vpow.pop %v520
        %v522 = vsel %vm515, %v521, 0.0
        %523 = vadd.xlane.f32.xlu0 %v522
        %v524 = vpop.xlane.xlu0 %523
        %v525 = vrcp.pop %v524
        %v526 = vmul.f32 %v521, %v525
        %v527 = vpack.c.bf16 %v526, %v526
        %v528 = vld [vmem:[#allocation4] sm:$0xf]
        %v530 = vsel %vm515, %v527, 0
        %vm532 = vcmask 1043456
        %v534 = vsel %vm532, %v528, 0
        %536 = vmatprep.subr.bf16.mxu0 0
        %537 = vmatpush1.bf16.msra.mxu0 %v534
        %538 = vmatprep.subr.bf16.mxu0 0
        %539 = vmatpush1.bf16.msra.mxu0 0
        %540 = vmatprep.subr.bf16.mxu0 0
        %541 = vmatpush1.bf16.msra.mxu0 0
        %542 = vmatprep.subr.bf16.mxu0 0
        %543 = vmatpush1.bf16.msra.mxu0 0
        %544 = vmatprep.subr.bf16.mxu0 0
        %545 = vmatpush1.bf16.msra.mxu0 0
        %546 = vmatprep.subr.bf16.mxu0 0
        %547 = vmatpush1.bf16.msra.mxu0 0
        %548 = vmatprep.subr.bf16.mxu0 0
        %549 = vmatpush1.bf16.msra.mxu0 0
        %550 = vmatprep.subr.bf16.mxu0 0
        %551 = vmatpush1.bf16.msra.mxu0 0
        %552 = vmatprep.subr.bf16.mxu0 0
        %553 = vmatpush1.bf16.msra.mxu0 0
        %554 = vmatprep.subr.bf16.mxu0 0
        %555 = vmatpush1.bf16.msra.mxu0 0
        %556 = vmatprep.subr.bf16.mxu0 0
        %557 = vmatpush1.bf16.msra.mxu0 0
        %558 = vmatprep.subr.bf16.mxu0 0
        %559 = vmatpush1.bf16.msra.mxu0 0
        %560 = vmatprep.subr.bf16.mxu0 0
        %561 = vmatpush1.bf16.msra.mxu0 0
        %562 = vmatprep.subr.bf16.mxu0 0
        %563 = vmatpush1.bf16.msra.mxu0 0
        %564 = vmatprep.subr.bf16.mxu0 0
        %565 = vmatpush1.bf16.msra.mxu0 0
        %566 = vmatprep.subr.bf16.mxu0 0
        %567 = vmatpush1.bf16.msra.mxu0 0
        %568 = vmatprep.mubr.bf16.mxu0 0
        %569 = vmatmul.mubr.bf16.gmra.mrb[0].mxu0 %v530
        %v570 = vpop.f32.mrb[0].mxu0
        %v571 = vadd.f32 0.0, %v570
        %v572 = vpop.f32.mrb[0].mxu0
        %v573 = vpop.f32.mrb[0].mxu0
        %v574 = vpop.f32.mrb[0].mxu0
        %575 = vdwg.mxu0
        %576 = vst.msk [vmem:[%s345] sm:$0xff] %vm462, %v571
        %577 = vst.msk [vmem:[%s352] sm:$0xff] %vm515, %v526
        %s578 = sand.u32 %s166, 1
        %s579 = scalar_lea.sflag [#allocation7], %s578
        %s580 = sand.u32 %s166, 1
        %s581 = smul.addr %s580, 8
        %s582 = scalar_lea.vmem [#allocation14], %s581
        %s583 = sand.u32 %s194, 1
        %s584 = scalar_lea.sflag [#allocation16], %s583
        %s585 = sand.u32 %s194, 1
        %s586 = smul.addr %s585, 8
        %s587 = scalar_lea.vmem [#allocation15], %s586
        // Predicated region
        $region65: #{tpu_custom_call.1} parent=39 // pred_check
          %p588 = pneg %p176
        $region66: #{tpu_custom_call.1} parent=39 // pred_check_branch
          %590 = sbr.rel (%p588) target = $region68
        $region67: #{tpu_custom_call.1} parent=39 // pred_region
          %s592 = ssub.s32 128, 128
          %593 = vsyncadd %s579, %s592
          %s594 = sadd.s32 %s34, %s33
          %s595 = smul.addr %s594, 128
          %s596 = scalar_lea.hbm %s5, %s595
          %s598 = sshll.u32 %s582, 4
          %s599 = int_to_ptr.vmem [resolvable:$true] %s598
          %601 = dma.vmem_to_hbm [thread:$0]  %s599, 128, %s596, %s579
        $region68: #{tpu_custom_call.1} parent=39 // pred_fallthru
          _
        // Predicated region
        $region69: #{tpu_custom_call.1} parent=39 // pred_check
          %p602 = pneg %p204
        $region70: #{tpu_custom_call.1} parent=39 // pred_check_branch
          %604 = sbr.rel (%p602) target = $region72
        $region71: #{tpu_custom_call.1} parent=39 // pred_region
          %s606 = ssub.s32 128, 128
          %607 = vsyncadd %s584, %s606
          %s608 = sadd.s32 %s34, %s33
          %s609 = smul.addr %s608, 128
          %s610 = scalar_lea.hbm %s6, %s609
          %s612 = sshll.u32 %s587, 4
          %s613 = int_to_ptr.vmem [resolvable:$true] %s612
          %615 = dma.vmem_to_hbm [thread:$0]  %s613, 128, %s610, %s584
        $region72: #{tpu_custom_call.1} parent=39 // pred_fallthru
          _
      $region40: #{tpu_custom_call.1} parent=5 // pred_fallthru
        _
      %p616 = scmp.le.s32.totalorder 2, %s24
      // Predicated region
      $region73: #{tpu_custom_call.1} parent=5 // pred_check
        %p617 = pneg %p616
      $region74: #{tpu_custom_call.1} parent=5 // pred_check_branch
        %619 = sbr.rel (%p617) target = $region76
      $region75: #{tpu_custom_call.1} parent=5 // pred_region
        %s620 = ssub.s32 %s24, 2
        // Predicated region
        $region77: #{tpu_custom_call.1} parent=75 // pred_check
          %p621 = pneg %p182
        $region78: #{tpu_custom_call.1} parent=75 // pred_check_branch
          %623 = sbr.rel (%p621) target = $region80
        $region79: #{tpu_custom_call.1} parent=75 // pred_region
          %s624 = sand.u32 %s167, 1
          %s625 = scalar_lea.sflag [#allocation7], %s624
          %s626 = sand.u32 %s167, 1
          %s627 = smul.addr %s626, 8
          %s628 = scalar_lea.vmem [#allocation14], %s627
          %629 = dma.done %s625, 128
        $region80: #{tpu_custom_call.1} parent=75 // pred_fallthru
          _
        // Predicated region
        $region81: #{tpu_custom_call.1} parent=75 // pred_check
          %p630 = pneg %p210
        $region82: #{tpu_custom_call.1} parent=75 // pred_check_branch
          %632 = sbr.rel (%p630) target = $region84
        $region83: #{tpu_custom_call.1} parent=75 // pred_region
          %s633 = sand.u32 %s195, 1
          %s634 = scalar_lea.sflag [#allocation16], %s633
          %s635 = sand.u32 %s195, 1
          %s636 = smul.addr %s635, 8
          %s637 = scalar_lea.vmem [#allocation15], %s636
          %638 = dma.done %s634, 128
        $region84: #{tpu_custom_call.1} parent=75 // pred_fallthru
          _
      $region76: #{tpu_custom_call.1} parent=5 // pred_fallthru
        _
    $region6: #{tpu_custom_call.1} parent=1 // loop_footer
      %s28 = sadd.s32 1, %s24
    $region7: #{tpu_custom_call.1} parent=1 // loop_footer_branch
      %23 = sbr.rel target = $region3
    $region8: #{tpu_custom_call.1} parent=1 // loop_exit
      _
    %639 = vsyncpa [#allocation6], 1
    %s640 = scalar_lea.sflag [#allocation6], 1
    %641 = vsyncpa %s640, 1
    %642 = vsyncpa [#allocation9], 1
    %643 = vsyncpa [#allocation12], 1
    %644 = vsyncpa [#allocation7], 1
    %s645 = scalar_lea.sflag [#allocation7], 1
    %646 = vsyncpa %s645, 1
    %647 = vsyncpa [#allocation16], 1
    %s648 = scalar_lea.sflag [#allocation16], 1
    %649 = vsyncpa %s648, 1

</llo_original>
